<compile_context>
chip_gen: v5e
topology: v5e:2x2
jax: 0.10.0
libtpu: 0.0.40
codegen_flags: <defaults>
</compile_context>

<pallas_src>
import jax
import jax.numpy as jnp
from jax import lax
from jax.experimental import pallas as pl
from jax.experimental.pallas import tpu as pltpu


_LANE = 128
# Scoped-VMEM ceiling safe on every generation (v5e/v6e: 128 MiB physical,
# v7x: 64 MiB physical). Tile selection uses the (smaller) budget below.
_VMEM_LIMIT_BYTES = 32 * 1024 * 1024


# ---------------------------------------------------------------------------
# Fused kernel: VMEM-resident table gather + mean + vocab-tiled linear.
# ---------------------------------------------------------------------------
def _fused_cbow_kernel(ctx_ref, emb_ref, w_ref, b_ref, out_ref, ctx_scr):
    """ctx_ref: SMEM (B, C) int32 ids (scalar prefetch).
    emb_ref:  (V, D) table, VMEM-resident (constant block index -> one big DMA).
    w_ref:    (TV, D) weight tile streamed over the vocab grid axis.
    b_ref:    (1, TV) f32 bias tile.
    out_ref:  (B, TV) f32 logits tile.
    ctx_scr:  (B, D) f32 scratch for the mean context vectors."""
    B, C = ctx_ref.shape
    inv_c = 1.0 / C
    # Gather + mean. Recomputed every vocab step: B*C (1, D) VMEM row reads and
    # C-1 VPU adds -- free filler under the (TV, D) weight stream -- which keeps
    # the vocab axis dependence-free ("parallel"-safe, 2-TC shardable on v7x).
    for b in range(B):
        s = emb_ref[pl.ds(ctx_ref[b, 0], 1), :].astype(jnp.float32)
        for c in range(1, C):
            s = s + emb_ref[pl.ds(ctx_ref[b, c], 1), :].astype(jnp.float32)
        ctx_scr[pl.ds(b, 1), :] = s * inv_c

    # (B, D) x (TV, D) contracted over D -> (B, TV); no weight transpose (the
    # MXU consumes the (TV, D) tile directly), f32 accumulation.
    logits = lax.dot_general(
        ctx_scr[...].astype(w_ref.dtype), w_ref[...],
        dimension_numbers=(((1,), (1,)), ((), ())),
        preferred_element_type=jnp.float32,
    )
    out_ref[...] = logits + b_ref[...]


# ---------------------------------------------------------------------------
# Fallback path (table too large for VMEM): DMA row gather + mean, then linear.
# ---------------------------------------------------------------------------
def _gather_mean_kernel(ctx_ref, emb_hbm, out_ref, rows, sems):
    """ctx_ref: SMEM (B, C) int32 ids. emb_hbm: (V, D) table left in HBM
    (pl.ANY) -- only the B*C needed rows move. out_ref: (B, D) f32 means.
    rows: (B*C, D) VMEM staging laid out [b*C + c]. sems: per-row DMA sems."""
    B, C = ctx_ref.shape
    copies = []
    for b in range(B):
        for c in range(C):
            i = b * C + c
            cp = pltpu.make_async_copy(
                emb_hbm.at[pl.ds(ctx_ref[b, c], 1), :],
                rows.at[pl.ds(i, 1), :],
                sems.at[i],
            )
            cp.start()
            copies.append(cp)

    inv_c = 1.0 / C
    # Wait reusing the exact descriptor objects; accumulate one batch row's mean
    # while the remaining rows' DMAs are still in flight.
    for b in range(B):
        i0 = b * C
        copies[i0].wait()
        s = rows[pl.ds(i0, 1), :].astype(jnp.float32)
        for c in range(1, C):
            copies[i0 + c].wait()
            s = s + rows[pl.ds(i0 + c, 1), :].astype(jnp.float32)
        out_ref[pl.ds(b, 1), :] = s * inv_c


def _linear_kernel(ctx_ref, w_ref, b_ref, out_ref):
    logits = lax.dot_general(
        ctx_ref[...].astype(w_ref.dtype), w_ref[...],
        dimension_numbers=(((1,), (1,)), ((), ())),
        preferred_element_type=jnp.float32,
    )
    out_ref[...] = logits + b_ref[...]


# ---------------------------------------------------------------------------
# Tiling / parameter preparation.
# ---------------------------------------------------------------------------
def _pick_tile_v(V_pad, D_pad, B_pad, w_itemsize, resident_bytes, budget):
    """Largest lane-aligned vocab tile whose double-buffered weight/bias/output
    tiles plus the VMEM-resident bytes fit the budget. V_pad is a multiple of
    128, so 128 always divides (no 'whole-V block' fallback)."""
    for tv in (4096, 2048, 1024, 512, 256, 128):
        if V_pad % tv:
            continue
        need = (resident_bytes
                + 2 * tv * D_pad * w_itemsize      # weight tiles (double-buffered)
                + 2 * tv * 4                       # bias tiles
                + 2 * B_pad * tv * 4               # output tiles
                + B_pad * D_pad * 4)               # ctx vector (scratch/resident)
        if need <= budget:
            return tv
    return 128


def prepare_cbow_params(emb_table, weight, bias, *, weight_dtype=None):
    """One-time parameter prep (NOT per forward call): pad D (module default 100
    -> 128) and V to lane multiples, and optionally store the output-layer
    weight persistently in a narrower dtype (bf16) so the kernel's dominant HBM
    stream is halved without a per-call wrapper cast."""
    V, D = emb_table.shape
    assert weight.shape == (V, D) and bias.shape == (V,)
    V_pad = pl.cdiv(V, _LANE) * _LANE
    D_pad = pl.cdiv(D, _LANE) * _LANE
    emb = jnp.pad(emb_table, ((0, V_pad - V), (0, D_pad - D)))
    w = jnp.pad(weight, ((0, V_pad - V), (0, D_pad - D)))
    if weight_dtype is not None:
        w = w.astype(weight_dtype)
    # TODO(synk): add an int8 (v5e/v6e MXU) or fp8 (v7x MXU) weight path with
    # per-tile scales to cut the weight stream another 2x.
    b2 = jnp.pad(bias.astype(jnp.float32), (0, V_pad - V)).reshape(1, V_pad)
    return {"emb": emb, "w": w, "b": b2, "vocab": int(V), "dim": int(D)}


# ---------------------------------------------------------------------------
# Forward pass.
# ---------------------------------------------------------------------------
def cbow_forward(context, params, *, tile_v=None,
                 vmem_budget_bytes=24 * 1024 * 1024):
    """context: (B, C) int token ids. params: output of prepare_cbow_params."""
    emb, w, b2 = params["emb"], params["w"], params["b"]
    V, _ = params["vocab"], params["dim"]
    V_pad, D_pad = emb.shape
    B, C = context.shape
    w_itemsize = w.dtype.itemsize

    # Pad the batch: 8 rows (f32 sublanes) or 16 (bf16 vreg packing). Padded
    # rows gather token 0 and produce garbage logits that are sliced off below.
    b_mult = 16 if w_itemsize < 4 else 8
    B_pad = max(b_mult, pl.cdiv(B, b_mult) * b_mult)
    ctx = context.astype(jnp.int32)
    if B_pad != B:
        ctx = jnp.pad(ctx, ((0, B_pad - B), (0, 0)))

    table_bytes = V_pad * D_pad * emb.dtype.itemsize
    # Fused path requires the table resident in VMEM (counted x2 to stay safe if
    # the pipeliner double-buffers the constant block).
    min_tile_need = (2 * _LANE * D_pad * w_itemsize + 2 * _LANE * 4
                     + 2 * B_pad * _LANE * 4 + B_pad * D_pad * 4)
    fused = (2 * table_bytes + min_tile_need) <= vmem_budget_bytes

    cost = pl.CostEstimate(
        flops=2 * B_pad * D_pad * V_pad,
        transcendentals=0,
        bytes_accessed=(V_pad * D_pad * w_itemsize + table_bytes
                        + V_pad * 4 + B_pad * V_pad * 4),
    )

    if fused:
        tv = tile_v if tile_v is not None else _pick_tile_v(
            V_pad, D_pad, B_pad, w_itemsize, 2 * table_bytes, vmem_budget_bytes)
        logits = pl.pallas_call(
            _fused_cbow_kernel,
            out_shape=jax.ShapeDtypeStruct((B_pad, V_pad), jnp.float32),
            grid_spec=pltpu.PrefetchScalarGridSpec(
                num_scalar_prefetch=1,                              # ids -> SMEM
                grid=(V_pad // tv,),
                in_specs=[
                    pl.BlockSpec((V_pad, D_pad), lambda j, ids: (0, 0)),  # table
                    pl.BlockSpec((tv, D_pad), lambda j, ids: (j, 0)),     # weight
                    pl.BlockSpec((1, tv), lambda j, ids: (0, j)),         # bias
                ],
                out_specs=pl.BlockSpec((B_pad, tv), lambda j, ids: (0, j)),
                scratch_shapes=[pltpu.VMEM((B_pad, D_pad), jnp.float32)],
            ),
            compiler_params=pltpu.CompilerParams(
                dimension_semantics=("parallel",),        # 2-TC shardable (v7x)
                vmem_limit_bytes=_VMEM_LIMIT_BYTES),
            cost_estimate=cost,
        )(ctx, emb, w, b2)
        return logits[:B, :V]

    # ---- Split fallback: table too large for VMEM --------------------------
    ctx_vec = pl.pallas_call(
        _gather_mean_kernel,
        out_shape=jax.ShapeDtypeStruct((B_pad, D_pad), jnp.float32),
        grid_spec=pltpu.PrefetchScalarGridSpec(
            num_scalar_prefetch=1,
            grid=(1,),
            in_specs=[pl.BlockSpec(memory_space=pl.ANY)],    # table stays in HBM
            out_specs=pl.BlockSpec((B_pad, D_pad), lambda i, ids: (0, 0)),
            scratch_shapes=[
                pltpu.VMEM((B_pad * C, D_pad), emb.dtype),
                pltpu.SemaphoreType.DMA((B_pad * C,)),
            ],
        ),
        compiler_params=pltpu.CompilerParams(
            dimension_semantics=("arbitrary",),
            vmem_limit_bytes=_VMEM_LIMIT_BYTES),
    )(ctx, emb)

    resident = 2 * B_pad * D_pad * 4   # ctx_vec input (double-buffered)
    tv = tile_v if tile_v is not None else _pick_tile_v(
        V_pad, D_pad, B_pad, w_itemsize, resident, vmem_budget_bytes)
    logits = pl.pallas_call(
        _linear_kernel,
        out_shape=jax.ShapeDtypeStruct((B_pad, V_pad), jnp.float32),
        grid_spec=pltpu.PrefetchScalarGridSpec(
            num_scalar_prefetch=0,
            grid=(V_pad // tv,),
            in_specs=[
                pl.BlockSpec((B_pad, D_pad), lambda j: (0, 0)),  # ctx resident
                pl.BlockSpec((tv, D_pad), lambda j: (j, 0)),     # weight stream
                pl.BlockSpec((1, tv), lambda j: (0, j)),         # bias
            ],
            out_specs=pl.BlockSpec((B_pad, tv), lambda j: (0, j)),
        ),
        compiler_params=pltpu.CompilerParams(
            dimension_semantics=("parallel",),
            vmem_limit_bytes=_VMEM_LIMIT_BYTES),
        cost_estimate=cost,
    )(ctx_vec, w, b2)
    return logits[:B, :V]


def cbow_reference(context, emb_table, weight, bias):
    emb = jnp.take(emb_table, context, axis=0)   # (B, C, D)
    ctx_vec = emb.mean(axis=1)                   # (B, D)
    return ctx_vec @ weight.T + bias             # (B, V)


if __name__ == "__main__":
    vocab_size = 2000     # deliberately not a multiple of 128 -> padded to 2048
    embedding_dim = 100   # module default; padded to 128 lanes
    batch = 8
    context_size = 4

    key = jax.random.PRNGKey(0)
    k_ctx, k_emb, k_w, k_b = jax.random.split(key, 4)

    context = jax.random.randint(
        k_ctx, (batch, context_size), 0, vocab_size, dtype=jnp.int32)
    emb_table = jax.random.normal(
        k_emb, (vocab_size, embedding_dim), dtype=jnp.float32) * 0.1
    weight = jax.random.normal(
        k_w, (vocab_size, embedding_dim), dtype=jnp.float32) * 0.1
    bias = jax.random.normal(k_b, (vocab_size,), dtype=jnp.float32) * 0.1

    ref = cbow_reference(context, emb_table, weight, bias)

    # Fused kernel, f32 weights (matches the torch module's f32 semantics).
    params_f32 = prepare_cbow_params(emb_table, weight, bias)
    out = jax.block_until_ready(cbow_forward(context, params_f32))
    assert out.shape == (batch, vocab_size)
    assert jnp.allclose(out, ref, atol=3e-3, rtol=3e-3), (
        f"f32 max err {jnp.max(jnp.abs(out - ref))}")

    # Persistent bf16 output weight (cast exactly once here, not per call).
    params_bf16 = prepare_cbow_params(emb_table, weight, bias,
                                      weight_dtype=jnp.bfloat16)
    out_bf16 = jax.block_until_ready(cbow_forward(context, params_bf16))
    assert jnp.allclose(out_bf16, ref, atol=5e-2, rtol=5e-2), (
        f"bf16 max err {jnp.max(jnp.abs(out_bf16 - ref))}")

    # Exercise the HBM DMA-gather fallback (tables that don't fit VMEM) by
    # shrinking the budget below the resident-table requirement.
    out_split = jax.block_until_ready(
        cbow_forward(context, params_f32, vmem_budget_bytes=2 * 1024 * 1024))
    assert jnp.allclose(out_split, ref, atol=3e-3, rtol=3e-3), (
        f"split max err {jnp.max(jnp.abs(out_split - ref))}")

    print("KERNEL_OK")
</pallas_src>

<mosaic_0001>
module attributes {stable_mosaic.version = 11 : i64} {
  func.func @_fused_cbow_kernel(%arg0: i32, %arg1: memref<8x4xi32, #tpu.memory_space<smem>>, %arg2: memref<2048x128xf32, #tpu.memory_space<vmem>>, %arg3: memref<2048x128xf32, #tpu.memory_space<vmem>>, %arg4: memref<1x2048xf32, #tpu.memory_space<vmem>>, %arg5: memref<8x2048xf32, #tpu.memory_space<vmem>>, %arg6: memref<8x128xf32, #tpu.memory_space<vmem>>) attributes {dimension_semantics = [#tpu.dimension_semantics<parallel>], iteration_bounds = array<i64: 1>, scalar_prefetch = 1 : i64, scratch_operands = 1 : i64, tpu.core_type = #tpu.core_type<tc>, window_params = [{pipeline_mode = #tpu.pipeline_mode<synchronous>, transform_indices = @transform_0, window_bounds = array<i64: 2048, 128>}, {transform_indices = @transform_1, window_bounds = array<i64: 2048, 128>}, {transform_indices = @transform_2, window_bounds = array<i64: 1, 2048>}, {transform_indices = @transform_3, window_bounds = array<i64: 8, 2048>}]} {
    %c0 = arith.constant 0 : index
    %c0_0 = arith.constant 0 : index
    %0 = memref.load %arg1[%c0, %c0_0] : memref<8x4xi32, #tpu.memory_space<smem>>
    %1 = arith.index_cast %0 : i32 to index
    %c0_1 = arith.constant 0 : index
    %2 = vector.load %arg2[%1, %c0_1] : memref<2048x128xf32, #tpu.memory_space<vmem>>, vector<1x128xf32>
    %c0_2 = arith.constant 0 : index
    %c1 = arith.constant 1 : index
    %3 = memref.load %arg1[%c0_2, %c1] : memref<8x4xi32, #tpu.memory_space<smem>>
    %4 = arith.index_cast %3 : i32 to index
    %c0_3 = arith.constant 0 : index
    %5 = vector.load %arg2[%4, %c0_3] : memref<2048x128xf32, #tpu.memory_space<vmem>>, vector<1x128xf32>
    %6 = arith.addf %2, %5 : vector<1x128xf32>
    %c0_4 = arith.constant 0 : index
    %c2 = arith.constant 2 : index
    %7 = memref.load %arg1[%c0_4, %c2] : memref<8x4xi32, #tpu.memory_space<smem>>
    %8 = arith.index_cast %7 : i32 to index
    %c0_5 = arith.constant 0 : index
    %9 = vector.load %arg2[%8, %c0_5] : memref<2048x128xf32, #tpu.memory_space<vmem>>, vector<1x128xf32>
    %10 = arith.addf %6, %9 : vector<1x128xf32>
    %c0_6 = arith.constant 0 : index
    %c3 = arith.constant 3 : index
    %11 = memref.load %arg1[%c0_6, %c3] : memref<8x4xi32, #tpu.memory_space<smem>>
    %12 = arith.index_cast %11 : i32 to index
    %c0_7 = arith.constant 0 : index
    %13 = vector.load %arg2[%12, %c0_7] : memref<2048x128xf32, #tpu.memory_space<vmem>>, vector<1x128xf32>
    %14 = arith.addf %10, %13 : vector<1x128xf32>
    %cst = arith.constant 2.500000e-01 : f32
    %15 = vector.broadcast %cst : f32 to vector<1x128xf32>
    %16 = arith.mulf %14, %15 : vector<1x128xf32>
    %c0_8 = arith.constant 0 : index
    %c0_9 = arith.constant 0 : index
    %17 = vector.load %arg6[%c0_8, %c0_9] : memref<8x128xf32, #tpu.memory_space<vmem>>, vector<1x128xf32>
    tpu.vector_store %arg6[%c0_8, %c0_9], %16 {strides = array<i32>} : memref<8x128xf32, #tpu.memory_space<vmem>>, vector<1x128xf32>,
    %c1_10 = arith.constant 1 : index
    %c0_11 = arith.constant 0 : index
    %18 = memref.load %arg1[%c1_10, %c0_11] : memref<8x4xi32, #tpu.memory_space<smem>>
    %19 = arith.index_cast %18 : i32 to index
    %c0_12 = arith.constant 0 : index
    %20 = vector.load %arg2[%19, %c0_12] : memref<2048x128xf32, #tpu.memory_space<vmem>>, vector<1x128xf32>
    %c1_13 = arith.constant 1 : index
    %c1_14 = arith.constant 1 : index
    %21 = memref.load %arg1[%c1_13, %c1_14] : memref<8x4xi32, #tpu.memory_space<smem>>
    %22 = arith.index_cast %21 : i32 to index
    %c0_15 = arith.constant 0 : index
    %23 = vector.load %arg2[%22, %c0_15] : memref<2048x128xf32, #tpu.memory_space<vmem>>, vector<1x128xf32>
    %24 = arith.addf %20, %23 : vector<1x128xf32>
    %c1_16 = arith.constant 1 : index
    %c2_17 = arith.constant 2 : index
    %25 = memref.load %arg1[%c1_16, %c2_17] : memref<8x4xi32, #tpu.memory_space<smem>>
    %26 = arith.index_cast %25 : i32 to index
    %c0_18 = arith.constant 0 : index
    %27 = vector.load %arg2[%26, %c0_18] : memref<2048x128xf32, #tpu.memory_space<vmem>>, vector<1x128xf32>
    %28 = arith.addf %24, %27 : vector<1x128xf32>
    %c1_19 = arith.constant 1 : index
    %c3_20 = arith.constant 3 : index
    %29 = memref.load %arg1[%c1_19, %c3_20] : memref<8x4xi32, #tpu.memory_space<smem>>
    %30 = arith.index_cast %29 : i32 to index
    %c0_21 = arith.constant 0 : index
    %31 = vector.load %arg2[%30, %c0_21] : memref<2048x128xf32, #tpu.memory_space<vmem>>, vector<1x128xf32>
    %32 = arith.addf %28, %31 : vector<1x128xf32>
    %cst_22 = arith.constant 2.500000e-01 : f32
    %33 = vector.broadcast %cst_22 : f32 to vector<1x128xf32>
    %34 = arith.mulf %32, %33 : vector<1x128xf32>
    %c1_23 = arith.constant 1 : index
    %c0_24 = arith.constant 0 : index
    %35 = vector.load %arg6[%c1_23, %c0_24] : memref<8x128xf32, #tpu.memory_space<vmem>>, vector<1x128xf32>
    tpu.vector_store %arg6[%c1_23, %c0_24], %34 {strides = array<i32>} : memref<8x128xf32, #tpu.memory_space<vmem>>, vector<1x128xf32>,
    %c2_25 = arith.constant 2 : index
    %c0_26 = arith.constant 0 : index
    %36 = memref.load %arg1[%c2_25, %c0_26] : memref<8x4xi32, #tpu.memory_space<smem>>
    %37 = arith.index_cast %36 : i32 to index
    %c0_27 = arith.constant 0 : index
    %38 = vector.load %arg2[%37, %c0_27] : memref<2048x128xf32, #tpu.memory_space<vmem>>, vector<1x128xf32>
    %c2_28 = arith.constant 2 : index
    %c1_29 = arith.constant 1 : index
    %39 = memref.load %arg1[%c2_28, %c1_29] : memref<8x4xi32, #tpu.memory_space<smem>>
    %40 = arith.index_cast %39 : i32 to index
    %c0_30 = arith.constant 0 : index
    %41 = vector.load %arg2[%40, %c0_30] : memref<2048x128xf32, #tpu.memory_space<vmem>>, vector<1x128xf32>
    %42 = arith.addf %38, %41 : vector<1x128xf32>
    %c2_31 = arith.constant 2 : index
    %c2_32 = arith.constant 2 : index
    %43 = memref.load %arg1[%c2_31, %c2_32] : memref<8x4xi32, #tpu.memory_space<smem>>
    %44 = arith.index_cast %43 : i32 to index
    %c0_33 = arith.constant 0 : index
    %45 = vector.load %arg2[%44, %c0_33] : memref<2048x128xf32, #tpu.memory_space<vmem>>, vector<1x128xf32>
    %46 = arith.addf %42, %45 : vector<1x128xf32>
    %c2_34 = arith.constant 2 : index
    %c3_35 = arith.constant 3 : index
    %47 = memref.load %arg1[%c2_34, %c3_35] : memref<8x4xi32, #tpu.memory_space<smem>>
    %48 = arith.index_cast %47 : i32 to index
    %c0_36 = arith.constant 0 : index
    %49 = vector.load %arg2[%48, %c0_36] : memref<2048x128xf32, #tpu.memory_space<vmem>>, vector<1x128xf32>
    %50 = arith.addf %46, %49 : vector<1x128xf32>
    %cst_37 = arith.constant 2.500000e-01 : f32
    %51 = vector.broadcast %cst_37 : f32 to vector<1x128xf32>
    %52 = arith.mulf %50, %51 : vector<1x128xf32>
    %c2_38 = arith.constant 2 : index
    %c0_39 = arith.constant 0 : index
    %53 = vector.load %arg6[%c2_38, %c0_39] : memref<8x128xf32, #tpu.memory_space<vmem>>, vector<1x128xf32>
    tpu.vector_store %arg6[%c2_38, %c0_39], %52 {strides = array<i32>} : memref<8x128xf32, #tpu.memory_space<vmem>>, vector<1x128xf32>,
    %c3_40 = arith.constant 3 : index
    %c0_41 = arith.constant 0 : index
    %54 = memref.load %arg1[%c3_40, %c0_41] : memref<8x4xi32, #tpu.memory_space<smem>>
    %55 = arith.index_cast %54 : i32 to index
    %c0_42 = arith.constant 0 : index
    %56 = vector.load %arg2[%55, %c0_42] : memref<2048x128xf32, #tpu.memory_space<vmem>>, vector<1x128xf32>
    %c3_43 = arith.constant 3 : index
    %c1_44 = arith.constant 1 : index
    %57 = memref.load %arg1[%c3_43, %c1_44] : memref<8x4xi32, #tpu.memory_space<smem>>
    %58 = arith.index_cast %57 : i32 to index
    %c0_45 = arith.constant 0 : index
    %59 = vector.load %arg2[%58, %c0_45] : memref<2048x128xf32, #tpu.memory_space<vmem>>, vector<1x128xf32>
    %60 = arith.addf %56, %59 : vector<1x128xf32>
    %c3_46 = arith.constant 3 : index
    %c2_47 = arith.constant 2 : index
    %61 = memref.load %arg1[%c3_46, %c2_47] : memref<8x4xi32, #tpu.memory_space<smem>>
    %62 = arith.index_cast %61 : i32 to index
    %c0_48 = arith.constant 0 : index
    %63 = vector.load %arg2[%62, %c0_48] : memref<2048x128xf32, #tpu.memory_space<vmem>>, vector<1x128xf32>
    %64 = arith.addf %60, %63 : vector<1x128xf32>
    %c3_49 = arith.constant 3 : index
    %c3_50 = arith.constant 3 : index
    %65 = memref.load %arg1[%c3_49, %c3_50] : memref<8x4xi32, #tpu.memory_space<smem>>
    %66 = arith.index_cast %65 : i32 to index
    %c0_51 = arith.constant 0 : index
    %67 = vector.load %arg2[%66, %c0_51] : memref<2048x128xf32, #tpu.memory_space<vmem>>, vector<1x128xf32>
    %68 = arith.addf %64, %67 : vector<1x128xf32>
    %cst_52 = arith.constant 2.500000e-01 : f32
    %69 = vector.broadcast %cst_52 : f32 to vector<1x128xf32>
    %70 = arith.mulf %68, %69 : vector<1x128xf32>
    %c3_53 = arith.constant 3 : index
    %c0_54 = arith.constant 0 : index
    %71 = vector.load %arg6[%c3_53, %c0_54] : memref<8x128xf32, #tpu.memory_space<vmem>>, vector<1x128xf32>
    tpu.vector_store %arg6[%c3_53, %c0_54], %70 {strides = array<i32>} : memref<8x128xf32, #tpu.memory_space<vmem>>, vector<1x128xf32>,
    %c4 = arith.constant 4 : index
    %c0_55 = arith.constant 0 : index
    %72 = memref.load %arg1[%c4, %c0_55] : memref<8x4xi32, #tpu.memory_space<smem>>
    %73 = arith.index_cast %72 : i32 to index
    %c0_56 = arith.constant 0 : index
    %74 = vector.load %arg2[%73, %c0_56] : memref<2048x128xf32, #tpu.memory_space<vmem>>, vector<1x128xf32>
    %c4_57 = arith.constant 4 : index
    %c1_58 = arith.constant 1 : index
    %75 = memref.load %arg1[%c4_57, %c1_58] : memref<8x4xi32, #tpu.memory_space<smem>>
    %76 = arith.index_cast %75 : i32 to index
    %c0_59 = arith.constant 0 : index
    %77 = vector.load %arg2[%76, %c0_59] : memref<2048x128xf32, #tpu.memory_space<vmem>>, vector<1x128xf32>
    %78 = arith.addf %74, %77 : vector<1x128xf32>
    %c4_60 = arith.constant 4 : index
    %c2_61 = arith.constant 2 : index
    %79 = memref.load %arg1[%c4_60, %c2_61] : memref<8x4xi32, #tpu.memory_space<smem>>
    %80 = arith.index_cast %79 : i32 to index
    %c0_62 = arith.constant 0 : index
    %81 = vector.load %arg2[%80, %c0_62] : memref<2048x128xf32, #tpu.memory_space<vmem>>, vector<1x128xf32>
    %82 = arith.addf %78, %81 : vector<1x128xf32>
    %c4_63 = arith.constant 4 : index
    %c3_64 = arith.constant 3 : index
    %83 = memref.load %arg1[%c4_63, %c3_64] : memref<8x4xi32, #tpu.memory_space<smem>>
    %84 = arith.index_cast %83 : i32 to index
    %c0_65 = arith.constant 0 : index
    %85 = vector.load %arg2[%84, %c0_65] : memref<2048x128xf32, #tpu.memory_space<vmem>>, vector<1x128xf32>
    %86 = arith.addf %82, %85 : vector<1x128xf32>
    %cst_66 = arith.constant 2.500000e-01 : f32
    %87 = vector.broadcast %cst_66 : f32 to vector<1x128xf32>
    %88 = arith.mulf %86, %87 : vector<1x128xf32>
    %c4_67 = arith.constant 4 : index
    %c0_68 = arith.constant 0 : index
    %89 = vector.load %arg6[%c4_67, %c0_68] : memref<8x128xf32, #tpu.memory_space<vmem>>, vector<1x128xf32>
    tpu.vector_store %arg6[%c4_67, %c0_68], %88 {strides = array<i32>} : memref<8x128xf32, #tpu.memory_space<vmem>>, vector<1x128xf32>,
    %c5 = arith.constant 5 : index
    %c0_69 = arith.constant 0 : index
    %90 = memref.load %arg1[%c5, %c0_69] : memref<8x4xi32, #tpu.memory_space<smem>>
    %91 = arith.index_cast %90 : i32 to index
    %c0_70 = arith.constant 0 : index
    %92 = vector.load %arg2[%91, %c0_70] : memref<2048x128xf32, #tpu.memory_space<vmem>>, vector<1x128xf32>
    %c5_71 = arith.constant 5 : index
    %c1_72 = arith.constant 1 : index
    %93 = memref.load %arg1[%c5_71, %c1_72] : memref<8x4xi32, #tpu.memory_space<smem>>
    %94 = arith.index_cast %93 : i32 to index
    %c0_73 = arith.constant 0 : index
    %95 = vector.load %arg2[%94, %c0_73] : memref<2048x128xf32, #tpu.memory_space<vmem>>, vector<1x128xf32>
    %96 = arith.addf %92, %95 : vector<1x128xf32>
    %c5_74 = arith.constant 5 : index
    %c2_75 = arith.constant 2 : index
    %97 = memref.load %arg1[%c5_74, %c2_75] : memref<8x4xi32, #tpu.memory_space<smem>>
    %98 = arith.index_cast %97 : i32 to index
    %c0_76 = arith.constant 0 : index
    %99 = vector.load %arg2[%98, %c0_76] : memref<2048x128xf32, #tpu.memory_space<vmem>>, vector<1x128xf32>
    %100 = arith.addf %96, %99 : vector<1x128xf32>
    %c5_77 = arith.constant 5 : index
    %c3_78 = arith.constant 3 : index
    %101 = memref.load %arg1[%c5_77, %c3_78] : memref<8x4xi32, #tpu.memory_space<smem>>
    %102 = arith.index_cast %101 : i32 to index
    %c0_79 = arith.constant 0 : index
    %103 = vector.load %arg2[%102, %c0_79] : memref<2048x128xf32, #tpu.memory_space<vmem>>, vector<1x128xf32>
    %104 = arith.addf %100, %103 : vector<1x128xf32>
    %cst_80 = arith.constant 2.500000e-01 : f32
    %105 = vector.broadcast %cst_80 : f32 to vector<1x128xf32>
    %106 = arith.mulf %104, %105 : vector<1x128xf32>
    %c5_81 = arith.constant 5 : index
    %c0_82 = arith.constant 0 : index
    %107 = vector.load %arg6[%c5_81, %c0_82] : memref<8x128xf32, #tpu.memory_space<vmem>>, vector<1x128xf32>
    tpu.vector_store %arg6[%c5_81, %c0_82], %106 {strides = array<i32>} : memref<8x128xf32, #tpu.memory_space<vmem>>, vector<1x128xf32>,
    %c6 = arith.constant 6 : index
    %c0_83 = arith.constant 0 : index
    %108 = memref.load %arg1[%c6, %c0_83] : memref<8x4xi32, #tpu.memory_space<smem>>
    %109 = arith.index_cast %108 : i32 to index
    %c0_84 = arith.constant 0 : index
    %110 = vector.load %arg2[%109, %c0_84] : memref<2048x128xf32, #tpu.memory_space<vmem>>, vector<1x128xf32>
    %c6_85 = arith.constant 6 : index
    %c1_86 = arith.constant 1 : index
    %111 = memref.load %arg1[%c6_85, %c1_86] : memref<8x4xi32, #tpu.memory_space<smem>>
    %112 = arith.index_cast %111 : i32 to index
    %c0_87 = arith.constant 0 : index
    %113 = vector.load %arg2[%112, %c0_87] : memref<2048x128xf32, #tpu.memory_space<vmem>>, vector<1x128xf32>
    %114 = arith.addf %110, %113 : vector<1x128xf32>
    %c6_88 = arith.constant 6 : index
    %c2_89 = arith.constant 2 : index
    %115 = memref.load %arg1[%c6_88, %c2_89] : memref<8x4xi32, #tpu.memory_space<smem>>
    %116 = arith.index_cast %115 : i32 to index
    %c0_90 = arith.constant 0 : index
    %117 = vector.load %arg2[%116, %c0_90] : memref<2048x128xf32, #tpu.memory_space<vmem>>, vector<1x128xf32>
    %118 = arith.addf %114, %117 : vector<1x128xf32>
    %c6_91 = arith.constant 6 : index
    %c3_92 = arith.constant 3 : index
    %119 = memref.load %arg1[%c6_91, %c3_92] : memref<8x4xi32, #tpu.memory_space<smem>>
    %120 = arith.index_cast %119 : i32 to index
    %c0_93 = arith.constant 0 : index
    %121 = vector.load %arg2[%120, %c0_93] : memref<2048x128xf32, #tpu.memory_space<vmem>>, vector<1x128xf32>
    %122 = arith.addf %118, %121 : vector<1x128xf32>
    %cst_94 = arith.constant 2.500000e-01 : f32
    %123 = vector.broadcast %cst_94 : f32 to vector<1x128xf32>
    %124 = arith.mulf %122, %123 : vector<1x128xf32>
    %c6_95 = arith.constant 6 : index
    %c0_96 = arith.constant 0 : index
    %125 = vector.load %arg6[%c6_95, %c0_96] : memref<8x128xf32, #tpu.memory_space<vmem>>, vector<1x128xf32>
    tpu.vector_store %arg6[%c6_95, %c0_96], %124 {strides = array<i32>} : memref<8x128xf32, #tpu.memory_space<vmem>>, vector<1x128xf32>,
    %c7 = arith.constant 7 : index
    %c0_97 = arith.constant 0 : index
    %126 = memref.load %arg1[%c7, %c0_97] : memref<8x4xi32, #tpu.memory_space<smem>>
    %127 = arith.index_cast %126 : i32 to index
    %c0_98 = arith.constant 0 : index
    %128 = vector.load %arg2[%127, %c0_98] : memref<2048x128xf32, #tpu.memory_space<vmem>>, vector<1x128xf32>
    %c7_99 = arith.constant 7 : index
    %c1_100 = arith.constant 1 : index
    %129 = memref.load %arg1[%c7_99, %c1_100] : memref<8x4xi32, #tpu.memory_space<smem>>
    %130 = arith.index_cast %129 : i32 to index
    %c0_101 = arith.constant 0 : index
    %131 = vector.load %arg2[%130, %c0_101] : memref<2048x128xf32, #tpu.memory_space<vmem>>, vector<1x128xf32>
    %132 = arith.addf %128, %131 : vector<1x128xf32>
    %c7_102 = arith.constant 7 : index
    %c2_103 = arith.constant 2 : index
    %133 = memref.load %arg1[%c7_102, %c2_103] : memref<8x4xi32, #tpu.memory_space<smem>>
    %134 = arith.index_cast %133 : i32 to index
    %c0_104 = arith.constant 0 : index
    %135 = vector.load %arg2[%134, %c0_104] : memref<2048x128xf32, #tpu.memory_space<vmem>>, vector<1x128xf32>
    %136 = arith.addf %132, %135 : vector<1x128xf32>
    %c7_105 = arith.constant 7 : index
    %c3_106 = arith.constant 3 : index
    %137 = memref.load %arg1[%c7_105, %c3_106] : memref<8x4xi32, #tpu.memory_space<smem>>
    %138 = arith.index_cast %137 : i32 to index
    %c0_107 = arith.constant 0 : index
    %139 = vector.load %arg2[%138, %c0_107] : memref<2048x128xf32, #tpu.memory_space<vmem>>, vector<1x128xf32>
    %140 = arith.addf %136, %139 : vector<1x128xf32>
    %cst_108 = arith.constant 2.500000e-01 : f32
    %141 = vector.broadcast %cst_108 : f32 to vector<1x128xf32>
    %142 = arith.mulf %140, %141 : vector<1x128xf32>
    %c7_109 = arith.constant 7 : index
    %c0_110 = arith.constant 0 : index
    %143 = vector.load %arg6[%c7_109, %c0_110] : memref<8x128xf32, #tpu.memory_space<vmem>>, vector<1x128xf32>
    tpu.vector_store %arg6[%c7_109, %c0_110], %142 {strides = array<i32>} : memref<8x128xf32, #tpu.memory_space<vmem>>, vector<1x128xf32>,
    %c0_111 = arith.constant 0 : index
    %c0_112 = arith.constant 0 : index
    %144 = vector.load %arg6[%c0_111, %c0_112] : memref<8x128xf32, #tpu.memory_space<vmem>>, vector<8x128xf32>
    %c0_113 = arith.constant 0 : index
    %c0_114 = arith.constant 0 : index
    %145 = vector.load %arg3[%c0_113, %c0_114] : memref<2048x128xf32, #tpu.memory_space<vmem>>, vector<2048x128xf32>
    %cst_115 = arith.constant dense<0.000000e+00> : vector<8x2048xf32>
    %146 = tpu.matmul %144, %145, %cst_115 {dimension_numbers = #tpu.dot_dimension_numbers<[1], [1], [0], [0], [0, 0, 1, 0], [], []>} : vector<8x128xf32>, vector<2048x128xf32>, vector<8x2048xf32> -> vector<8x2048xf32>
    %c0_116 = arith.constant 0 : index
    %c0_117 = arith.constant 0 : index
    %147 = vector.load %arg4[%c0_116, %c0_117] : memref<1x2048xf32, #tpu.memory_space<vmem>>, vector<1x2048xf32>
    %148 = vector.broadcast %147 : vector<1x2048xf32> to vector<8x2048xf32>
    %149 = arith.addf %146, %148 : vector<8x2048xf32>
    %c0_118 = arith.constant 0 : index
    %c0_119 = arith.constant 0 : index
    %150 = vector.load %arg5[%c0_118, %c0_119] : memref<8x2048xf32, #tpu.memory_space<vmem>>, vector<8x2048xf32>
    tpu.vector_store %arg5[%c0_118, %c0_119], %149 {strides = array<i32>} : memref<8x2048xf32, #tpu.memory_space<vmem>>, vector<8x2048xf32>,
    return
  }
  func.func @transform_0(%arg0: i32, %arg1: memref<8x4xi32, #tpu.memory_space<smem>>) -> (i32, i32) {
    %c0_i32 = arith.constant 0 : i32
    %c0_i32_0 = arith.constant 0 : i32
    %c0_i32_1 = arith.constant 0 : i32
    return %c0_i32, %c0_i32_0 : i32, i32
  }
  func.func @transform_1(%arg0: i32, %arg1: memref<8x4xi32, #tpu.memory_space<smem>>) -> (i32, i32) {
    %c0_i32 = arith.constant 0 : i32
    %c0_i32_0 = arith.constant 0 : i32
    return %arg0, %c0_i32 : i32, i32
  }
  func.func @transform_2(%arg0: i32, %arg1: memref<8x4xi32, #tpu.memory_space<smem>>) -> (i32, i32) {
    %c0_i32 = arith.constant 0 : i32
    %c0_i32_0 = arith.constant 0 : i32
    return %c0_i32, %arg0 : i32, i32
  }
  func.func @transform_3(%arg0: i32, %arg1: memref<8x4xi32, #tpu.memory_space<smem>>) -> (i32, i32) {
    %c0_i32 = arith.constant 0 : i32
    %c0_i32_0 = arith.constant 0 : i32
    return %c0_i32, %arg0 : i32, i32
  }
}

</mosaic_0001>

<llo_original>
// kernel: tpu_custom_call.1
$region0: #{tpu_custom_call.1}
  #allocation0 [shape = 'u32[]', space=smem, size = 0x4, offset = 0x4, fixed_abs, tag = 'smem constant byte address 0x4 - core index']
  #allocation1 [shape = 'u32[72,128]{1,0:T(1,128)}', space=vmem, size = 0x9000, scoped, tag = 'internal scratch']
  #allocation2 [shape = 'f32[8,128]{1,0:T(8,128)}', space=vmem, size = 0x1000, scoped, tag = 'scratch operand']
  #allocation3 [shape = 's32[1]{0}', space=sflag, size = 0x4, scoped, tag = 'scoped memory for tpu_custom_call.1']
  #allocation4 [shape = 'u8[4096]{0}', space=smem, size = 0x1000, scoped, tag = 'prefetched SMEM operand 0']
  %s0 = inlined_call_operand.vmem [shape: s32[8,4], index: 0, kind: input, shape index: {}]
  %s1 = inlined_call_operand.hbm [shape: f32[2048,128], index: 1, kind: input, shape index: {}]
  %s2 = inlined_call_operand.hbm [shape: f32[2048,128], index: 2, kind: input, shape index: {}]
  %s3 = inlined_call_operand.hbm [shape: f32[1,2048], index: 3, kind: input, shape index: {}]
  %s4 = inlined_call_operand.hbm [shape: f32[8,2048], index: 4, kind: output, shape index: {}]
  %s5 = sld [smem:[#allocation0]]
  $region34: #{tpu_custom_call.1} parent=0
    _
  %s7 = ssub.s32 1, %s5
  %s8 = scalar_select 0, %s7, %s5
  %s10 = sshll.u32 %s0, 4
  %s11 = int_to_ptr.vmem [resolvable:$true] %s10
  %13 = dma.vmem_to_smem %s11, 128, [#allocation4], [#allocation3]
  %15 = dma.done [#allocation3], 128
  %16 = sfence
  $region1: #{tpu_custom_call.1} parent=0
    #allocation5 [shape = 'u8[1048576]{0}', space=vmem, size = 0x100000, scoped, tag = 'input window, operand 1, single buffered']
    #allocation6 [shape = 's32[1]{0}', space=sflag, size = 0x4, scoped, tag = 'scoped memory for tpu_custom_call.1']
    #allocation7 [shape = 's32[1]{0}', space=sflag, size = 0x4, scoped, tag = 'scoped memory for tpu_custom_call.1']
    #allocation8 [shape = 'u8[1048576]{0}', space=vmem, size = 0x100000, scoped, tag = 'input window, operand 2, single buffered']
    #allocation9 [shape = 's32[1]{0}', space=sflag, size = 0x4, scoped, tag = 'scoped memory for tpu_custom_call.1']
    #allocation10 [shape = 'u8[8192]{0}', space=vmem, size = 0x2000, scoped, tag = 'input window, operand 3, single buffered']
    #allocation11 [shape = 'u8[65536]{0}', space=vmem, size = 0x10000, scoped, tag = 'output window, operand 0, single buffered']
    %17 = vsyncpa [#allocation6], 0
    %18 = vsyncpa [#allocation9], 0
    %19 = vsyncpa [#allocation7], 0
    // Predicated region
    $region2: #{tpu_custom_call.1} parent=1 // pred_check
      _
    $region3: #{tpu_custom_call.1} parent=1 // pred_check_branch
      %21 = sbr.rel (0) target = $region5
    $region4: #{tpu_custom_call.1} parent=1 // pred_region
      %23 = vsyncadd [#allocation6], 0
      %s24 = sshll.u32 %s1, 4
      %s25 = int_to_ptr.hbm [resolvable:$true] %s24
      %s26 = sshll.u32 [#allocation5], 4
      %s27 = int_to_ptr.vmem [resolvable:$true] %s26
      %32 = dma.hbm_to_vmem [thread:$0]  %s25, 32768, %s27, [#allocation6], 128, 128, 8
    $region5: #{tpu_custom_call.1} parent=1 // pred_fallthru
      _
    // Predicated region
    $region6: #{tpu_custom_call.1} parent=1 // pred_check
      _
    $region7: #{tpu_custom_call.1} parent=1 // pred_check_branch
      %34 = sbr.rel (0) target = $region9
    $region8: #{tpu_custom_call.1} parent=1 // pred_region
      %36 = vsyncadd [#allocation9], 0
      %s37 = sshll.u32 %s2, 4
      %s38 = int_to_ptr.hbm [resolvable:$true] %s37
      %s39 = sshll.u32 [#allocation8], 4
      %s40 = int_to_ptr.vmem [resolvable:$true] %s39
      %45 = dma.hbm_to_vmem [thread:$0]  %s38, 32768, %s40, [#allocation9], 128, 128, 8
    $region9: #{tpu_custom_call.1} parent=1 // pred_fallthru
      _
    // Predicated region
    $region10: #{tpu_custom_call.1} parent=1 // pred_check
      _
    $region11: #{tpu_custom_call.1} parent=1 // pred_check_branch
      %47 = sbr.rel (0) target = $region13
    $region12: #{tpu_custom_call.1} parent=1 // pred_region
      %49 = vsyncadd [#allocation9], 0
      %s51 = sshll.u32 %s3, 4
      %s52 = int_to_ptr.hbm [resolvable:$true] %s51
      %s53 = sshll.u32 [#allocation10], 4
      %s54 = int_to_ptr.vmem [resolvable:$true] %s53
      %56 = dma.hbm_to_vmem [thread:$0]  %s52, 256, %s54, [#allocation9]
    $region13: #{tpu_custom_call.1} parent=1 // pred_fallthru
      _
    // Predicated region
    $region14: #{tpu_custom_call.1} parent=1 // pred_check
      _
    $region15: #{tpu_custom_call.1} parent=1 // pred_check_branch
      %58 = sbr.rel (0) target = $region17
    $region16: #{tpu_custom_call.1} parent=1 // pred_region
      %60 = dma.done [#allocation6], 32768
    $region17: #{tpu_custom_call.1} parent=1 // pred_fallthru
      _
    // Predicated region
    $region18: #{tpu_custom_call.1} parent=1 // pred_check
      _
    $region19: #{tpu_custom_call.1} parent=1 // pred_check_branch
      %62 = sbr.rel (0) target = $region21
    $region20: #{tpu_custom_call.1} parent=1 // pred_region
      %64 = dma.done [#allocation9], 32768
    $region21: #{tpu_custom_call.1} parent=1 // pred_fallthru
      _
    // Predicated region
    $region22: #{tpu_custom_call.1} parent=1 // pred_check
      _
    $region23: #{tpu_custom_call.1} parent=1 // pred_check_branch
      %66 = sbr.rel (0) target = $region25
    $region24: #{tpu_custom_call.1} parent=1 // pred_region
      %68 = dma.done [#allocation9], 256
    $region25: #{tpu_custom_call.1} parent=1 // pred_fallthru
      _
    %s69 = sld [smem:[#allocation4]]
    %s70 = scalar_lea.vmem [#allocation5], %s69
    %v71 = vld [vmem:[%s70] sm:$0x1]
    %s72 = sld [smem:[#allocation4 + $0x1]]
    %s73 = scalar_lea.vmem [#allocation5], %s72
    %v74 = vld [vmem:[%s73] sm:$0x1]
    %v75 = vadd.f32 %v71, %v74
    %s76 = sld [smem:[#allocation4 + $0x2]]
    %s77 = scalar_lea.vmem [#allocation5], %s76
    %v78 = vld [vmem:[%s77] sm:$0x1]
    %v79 = vadd.f32 %v75, %v78
    %s80 = sld [smem:[#allocation4 + $0x3]]
    %s81 = scalar_lea.vmem [#allocation5], %s80
    %v82 = vld [vmem:[%s81] sm:$0x1]
    %v83 = vadd.f32 %v79, %v82
    %v84 = vmul.f32 %v83, 0.25
    %85 = vst [vmem:[#allocation2] sm:$0x1] %v84
    %s86 = sld [smem:[#allocation4 + $0x80]]
    %s87 = scalar_lea.vmem [#allocation5], %s86
    %v88 = vld [vmem:[%s87] sm:$0x1]
    %s89 = sld [smem:[#allocation4 + $0x81]]
    %s90 = scalar_lea.vmem [#allocation5], %s89
    %v91 = vld [vmem:[%s90] sm:$0x1]
    %v92 = vadd.f32 %v88, %v91
    %s93 = sld [smem:[#allocation4 + $0x82]]
    %s94 = scalar_lea.vmem [#allocation5], %s93
    %v95 = vld [vmem:[%s94] sm:$0x1]
    %v96 = vadd.f32 %v92, %v95
    %s97 = sld [smem:[#allocation4 + $0x83]]
    %s98 = scalar_lea.vmem [#allocation5], %s97
    %v99 = vld [vmem:[%s98] sm:$0x1]
    %v100 = vadd.f32 %v96, %v99
    %v101 = vmul.f32 %v100, 0.25
    %102 = vst [vmem:[#allocation2 + $0x1] sm:$0x1] %v101
    %s103 = sld [smem:[#allocation4 + $0x100]]
    %s104 = scalar_lea.vmem [#allocation5], %s103
    %v105 = vld [vmem:[%s104] sm:$0x1]
    %s106 = sld [smem:[#allocation4 + $0x101]]
    %s107 = scalar_lea.vmem [#allocation5], %s106
    %v108 = vld [vmem:[%s107] sm:$0x1]
    %v109 = vadd.f32 %v105, %v108
    %s110 = sld [smem:[#allocation4 + $0x102]]
    %s111 = scalar_lea.vmem [#allocation5], %s110
    %v112 = vld [vmem:[%s111] sm:$0x1]
    %v113 = vadd.f32 %v109, %v112
    %s114 = sld [smem:[#allocation4 + $0x103]]
    %s115 = scalar_lea.vmem [#allocation5], %s114
    %v116 = vld [vmem:[%s115] sm:$0x1]
    %v117 = vadd.f32 %v113, %v116
    %v118 = vmul.f32 %v117, 0.25
    %119 = vst [vmem:[#allocation2 + $0x2] sm:$0x1] %v118
    %s120 = sld [smem:[#allocation4 + $0x180]]
    %s121 = scalar_lea.vmem [#allocation5], %s120
    %v122 = vld [vmem:[%s121] sm:$0x1]
    %s123 = sld [smem:[#allocation4 + $0x181]]
    %s124 = scalar_lea.vmem [#allocation5], %s123
    %v125 = vld [vmem:[%s124] sm:$0x1]
    %v126 = vadd.f32 %v122, %v125
    %s127 = sld [smem:[#allocation4 + $0x182]]
    %s128 = scalar_lea.vmem [#allocation5], %s127
    %v129 = vld [vmem:[%s128] sm:$0x1]
    %v130 = vadd.f32 %v126, %v129
    %s131 = sld [smem:[#allocation4 + $0x183]]
    %s132 = scalar_lea.vmem [#allocation5], %s131
    %v133 = vld [vmem:[%s132] sm:$0x1]
    %v134 = vadd.f32 %v130, %v133
    %v135 = vmul.f32 %v134, 0.25
    %136 = vst [vmem:[#allocation2 + $0x3] sm:$0x1] %v135
    %s137 = sld [smem:[#allocation4 + $0x200]]
    %s138 = scalar_lea.vmem [#allocation5], %s137
    %v139 = vld [vmem:[%s138] sm:$0x1]
    %s140 = sld [smem:[#allocation4 + $0x201]]
    %s141 = scalar_lea.vmem [#allocation5], %s140
    %v142 = vld [vmem:[%s141] sm:$0x1]
    %v143 = vadd.f32 %v139, %v142
    %s144 = sld [smem:[#allocation4 + $0x202]]
    %s145 = scalar_lea.vmem [#allocation5], %s144
    %v146 = vld [vmem:[%s145] sm:$0x1]
    %v147 = vadd.f32 %v143, %v146
    %s148 = sld [smem:[#allocation4 + $0x203]]
    %s149 = scalar_lea.vmem [#allocation5], %s148
    %v150 = vld [vmem:[%s149] sm:$0x1]
    %v151 = vadd.f32 %v147, %v150
    %v152 = vmul.f32 %v151, 0.25
    %153 = vst [vmem:[#allocation2 + $0x4] sm:$0x1] %v152
    %s154 = sld [smem:[#allocation4 + $0x280]]
    %s155 = scalar_lea.vmem [#allocation5], %s154
    %v156 = vld [vmem:[%s155] sm:$0x1]
    %s157 = sld [smem:[#allocation4 + $0x281]]
    %s158 = scalar_lea.vmem [#allocation5], %s157
    %v159 = vld [vmem:[%s158] sm:$0x1]
    %v160 = vadd.f32 %v156, %v159
    %s161 = sld [smem:[#allocation4 + $0x282]]
    %s162 = scalar_lea.vmem [#allocation5], %s161
    %v163 = vld [vmem:[%s162] sm:$0x1]
    %v164 = vadd.f32 %v160, %v163
    %s165 = sld [smem:[#allocation4 + $0x283]]
    %s166 = scalar_lea.vmem [#allocation5], %s165
    %v167 = vld [vmem:[%s166] sm:$0x1]
    %v168 = vadd.f32 %v164, %v167
    %v169 = vmul.f32 %v168, 0.25
    %170 = vst [vmem:[#allocation2 + $0x5] sm:$0x1] %v169
    %s171 = sld [smem:[#allocation4 + $0x300]]
    %s172 = scalar_lea.vmem [#allocation5], %s171
    %v173 = vld [vmem:[%s172] sm:$0x1]
    %s174 = sld [smem:[#allocation4 + $0x301]]
    %s175 = scalar_lea.vmem [#allocation5], %s174
    %v176 = vld [vmem:[%s175] sm:$0x1]
    %v177 = vadd.f32 %v173, %v176
    %s178 = sld [smem:[#allocation4 + $0x302]]
    %s179 = scalar_lea.vmem [#allocation5], %s178
    %v180 = vld [vmem:[%s179] sm:$0x1]
    %v181 = vadd.f32 %v177, %v180
    %s182 = sld [smem:[#allocation4 + $0x303]]
    %s183 = scalar_lea.vmem [#allocation5], %s182
    %v184 = vld [vmem:[%s183] sm:$0x1]
    %v185 = vadd.f32 %v181, %v184
    %v186 = vmul.f32 %v185, 0.25
    %187 = vst [vmem:[#allocation2 + $0x6] sm:$0x1] %v186
    %s188 = sld [smem:[#allocation4 + $0x380]]
    %s189 = scalar_lea.vmem [#allocation5], %s188
    %v190 = vld [vmem:[%s189] sm:$0x1]
    %s191 = sld [smem:[#allocation4 + $0x381]]
    %s192 = scalar_lea.vmem [#allocation5], %s191
    %v193 = vld [vmem:[%s192] sm:$0x1]
    %v194 = vadd.f32 %v190, %v193
    %s195 = sld [smem:[#allocation4 + $0x382]]
    %s196 = scalar_lea.vmem [#allocation5], %s195
    %v197 = vld [vmem:[%s196] sm:$0x1]
    %v198 = vadd.f32 %v194, %v197
    %s199 = sld [smem:[#allocation4 + $0x383]]
    %s200 = scalar_lea.vmem [#allocation5], %s199
    %v201 = vld [vmem:[%s200] sm:$0x1]
    %v202 = vadd.f32 %v198, %v201
    %v203 = vmul.f32 %v202, 0.25
    %204 = vst [vmem:[#allocation2 + $0x7] sm:$0x1] %v203
    %v205 = vld [vmem:[#allocation2] sm:$0xff]
    %v206 = vld [vmem:[#allocation8] sm:$0xff]
    %v207 = vld [vmem:[#allocation8 + $0x8] sm:$0xff]
    %v208 = vld [vmem:[#allocation8 + $0x10] sm:$0xff]
    %v209 = vld [vmem:[#allocation8 + $0x18] sm:$0xff]
    %v210 = vld [vmem:[#allocation8 + $0x20] sm:$0xff]
    %v211 = vld [vmem:[#allocation8 + $0x28] sm:$0xff]
    %v212 = vld [vmem:[#allocation8 + $0x30] sm:$0xff]
    %v213 = vld [vmem:[#allocation8 + $0x38] sm:$0xff]
    %v214 = vld [vmem:[#allocation8 + $0x40] sm:$0xff]
    %v215 = vld [vmem:[#allocation8 + $0x48] sm:$0xff]
    %v216 = vld [vmem:[#allocation8 + $0x50] sm:$0xff]
    %v217 = vld [vmem:[#allocation8 + $0x58] sm:$0xff]
    %v218 = vld [vmem:[#allocation8 + $0x60] sm:$0xff]
    %v219 = vld [vmem:[#allocation8 + $0x68] sm:$0xff]
    %v220 = vld [vmem:[#allocation8 + $0x70] sm:$0xff]
    %v221 = vld [vmem:[#allocation8 + $0x78] sm:$0xff]
    %v222 = vld [vmem:[#allocation8 + $0x80] sm:$0xff]
    %v223 = vld [vmem:[#allocation8 + $0x88] sm:$0xff]
    %v224 = vld [vmem:[#allocation8 + $0x90] sm:$0xff]
    %v225 = vld [vmem:[#allocation8 + $0x98] sm:$0xff]
    %v226 = vld [vmem:[#allocation8 + $0xa0] sm:$0xff]
    %v227 = vld [vmem:[#allocation8 + $0xa8] sm:$0xff]
    %v228 = vld [vmem:[#allocation8 + $0xb0] sm:$0xff]
    %v229 = vld [vmem:[#allocation8 + $0xb8] sm:$0xff]
    %v230 = vld [vmem:[#allocation8 + $0xc0] sm:$0xff]
    %v231 = vld [vmem:[#allocation8 + $0xc8] sm:$0xff]
    %v232 = vld [vmem:[#allocation8 + $0xd0] sm:$0xff]
    %v233 = vld [vmem:[#allocation8 + $0xd8] sm:$0xff]
    %v234 = vld [vmem:[#allocation8 + $0xe0] sm:$0xff]
    %v235 = vld [vmem:[#allocation8 + $0xe8] sm:$0xff]
    %v236 = vld [vmem:[#allocation8 + $0xf0] sm:$0xff]
    %v237 = vld [vmem:[#allocation8 + $0xf8] sm:$0xff]
    %v238 = vld [vmem:[#allocation8 + $0x100] sm:$0xff]
    %v239 = vld [vmem:[#allocation8 + $0x108] sm:$0xff]
    %v240 = vld [vmem:[#allocation8 + $0x110] sm:$0xff]
    %v241 = vld [vmem:[#allocation8 + $0x118] sm:$0xff]
    %v242 = vld [vmem:[#allocation8 + $0x120] sm:$0xff]
    %v243 = vld [vmem:[#allocation8 + $0x128] sm:$0xff]
    %v244 = vld [vmem:[#allocation8 + $0x130] sm:$0xff]
    %v245 = vld [vmem:[#allocation8 + $0x138] sm:$0xff]
    %v246 = vld [vmem:[#allocation8 + $0x140] sm:$0xff]
    %v247 = vld [vmem:[#allocation8 + $0x148] sm:$0xff]
    %v248 = vld [vmem:[#allocation8 + $0x150] sm:$0xff]
    %v249 = vld [vmem:[#allocation8 + $0x158] sm:$0xff]
    %v250 = vld [vmem:[#allocation8 + $0x160] sm:$0xff]
    %v251 = vld [vmem:[#allocation8 + $0x168] sm:$0xff]
    %v252 = vld [vmem:[#allocation8 + $0x170] sm:$0xff]
    %v253 = vld [vmem:[#allocation8 + $0x178] sm:$0xff]
    %v254 = vld [vmem:[#allocation8 + $0x180] sm:$0xff]
    %v255 = vld [vmem:[#allocation8 + $0x188] sm:$0xff]
    %v256 = vld [vmem:[#allocation8 + $0x190] sm:$0xff]
    %v257 = vld [vmem:[#allocation8 + $0x198] sm:$0xff]
    %v258 = vld [vmem:[#allocation8 + $0x1a0] sm:$0xff]
    %v259 = vld [vmem:[#allocation8 + $0x1a8] sm:$0xff]
    %v260 = vld [vmem:[#allocation8 + $0x1b0] sm:$0xff]
    %v261 = vld [vmem:[#allocation8 + $0x1b8] sm:$0xff]
    %v262 = vld [vmem:[#allocation8 + $0x1c0] sm:$0xff]
    %v263 = vld [vmem:[#allocation8 + $0x1c8] sm:$0xff]
    %v264 = vld [vmem:[#allocation8 + $0x1d0] sm:$0xff]
    %v265 = vld [vmem:[#allocation8 + $0x1d8] sm:$0xff]
    %v266 = vld [vmem:[#allocation8 + $0x1e0] sm:$0xff]
    %v267 = vld [vmem:[#allocation8 + $0x1e8] sm:$0xff]
    %v268 = vld [vmem:[#allocation8 + $0x1f0] sm:$0xff]
    %v269 = vld [vmem:[#allocation8 + $0x1f8] sm:$0xff]
    %v270 = vld [vmem:[#allocation8 + $0x200] sm:$0xff]
    %v271 = vld [vmem:[#allocation8 + $0x208] sm:$0xff]
    %v272 = vld [vmem:[#allocation8 + $0x210] sm:$0xff]
    %v273 = vld [vmem:[#allocation8 + $0x218] sm:$0xff]
    %v274 = vld [vmem:[#allocation8 + $0x220] sm:$0xff]
    %v275 = vld [vmem:[#allocation8 + $0x228] sm:$0xff]
    %v276 = vld [vmem:[#allocation8 + $0x230] sm:$0xff]
    %v277 = vld [vmem:[#allocation8 + $0x238] sm:$0xff]
    %v278 = vld [vmem:[#allocation8 + $0x240] sm:$0xff]
    %v279 = vld [vmem:[#allocation8 + $0x248] sm:$0xff]
    %v280 = vld [vmem:[#allocation8 + $0x250] sm:$0xff]
    %v281 = vld [vmem:[#allocation8 + $0x258] sm:$0xff]
    %v282 = vld [vmem:[#allocation8 + $0x260] sm:$0xff]
    %v283 = vld [vmem:[#allocation8 + $0x268] sm:$0xff]
    %v284 = vld [vmem:[#allocation8 + $0x270] sm:$0xff]
    %v285 = vld [vmem:[#allocation8 + $0x278] sm:$0xff]
    %v286 = vld [vmem:[#allocation8 + $0x280] sm:$0xff]
    %v287 = vld [vmem:[#allocation8 + $0x288] sm:$0xff]
    %v288 = vld [vmem:[#allocation8 + $0x290] sm:$0xff]
    %v289 = vld [vmem:[#allocation8 + $0x298] sm:$0xff]
    %v290 = vld [vmem:[#allocation8 + $0x2a0] sm:$0xff]
    %v291 = vld [vmem:[#allocation8 + $0x2a8] sm:$0xff]
    %v292 = vld [vmem:[#allocation8 + $0x2b0] sm:$0xff]
    %v293 = vld [vmem:[#allocation8 + $0x2b8] sm:$0xff]
    %v294 = vld [vmem:[#allocation8 + $0x2c0] sm:$0xff]
    %v295 = vld [vmem:[#allocation8 + $0x2c8] sm:$0xff]
    %v296 = vld [vmem:[#allocation8 + $0x2d0] sm:$0xff]
    %v297 = vld [vmem:[#allocation8 + $0x2d8] sm:$0xff]
    %v298 = vld [vmem:[#allocation8 + $0x2e0] sm:$0xff]
    %v299 = vld [vmem:[#allocation8 + $0x2e8] sm:$0xff]
    %v300 = vld [vmem:[#allocation8 + $0x2f0] sm:$0xff]
    %v301 = vld [vmem:[#allocation8 + $0x2f8] sm:$0xff]
    %v302 = vld [vmem:[#allocation8 + $0x300] sm:$0xff]
    %v303 = vld [vmem:[#allocation8 + $0x308] sm:$0xff]
    %v304 = vld [vmem:[#allocation8 + $0x310] sm:$0xff]
    %v305 = vld [vmem:[#allocation8 + $0x318] sm:$0xff]
    %v306 = vld [vmem:[#allocation8 + $0x320] sm:$0xff]
    %v307 = vld [vmem:[#allocation8 + $0x328] sm:$0xff]
    %v308 = vld [vmem:[#allocation8 + $0x330] sm:$0xff]
    %v309 = vld [vmem:[#allocation8 + $0x338] sm:$0xff]
    %v310 = vld [vmem:[#allocation8 + $0x340] sm:$0xff]
    %v311 = vld [vmem:[#allocation8 + $0x348] sm:$0xff]
    %v312 = vld [vmem:[#allocation8 + $0x350] sm:$0xff]
    %v313 = vld [vmem:[#allocation8 + $0x358] sm:$0xff]
    %v314 = vld [vmem:[#allocation8 + $0x360] sm:$0xff]
    %v315 = vld [vmem:[#allocation8 + $0x368] sm:$0xff]
    %v316 = vld [vmem:[#allocation8 + $0x370] sm:$0xff]
    %v317 = vld [vmem:[#allocation8 + $0x378] sm:$0xff]
    %v318 = vld [vmem:[#allocation8 + $0x380] sm:$0xff]
    %v319 = vld [vmem:[#allocation8 + $0x388] sm:$0xff]
    %v320 = vld [vmem:[#allocation8 + $0x390] sm:$0xff]
    %v321 = vld [vmem:[#allocation8 + $0x398] sm:$0xff]
    %v322 = vld [vmem:[#allocation8 + $0x3a0] sm:$0xff]
    %v323 = vld [vmem:[#allocation8 + $0x3a8] sm:$0xff]
    %v324 = vld [vmem:[#allocation8 + $0x3b0] sm:$0xff]
    %v325 = vld [vmem:[#allocation8 + $0x3b8] sm:$0xff]
    %v326 = vld [vmem:[#allocation8 + $0x3c0] sm:$0xff]
    %v327 = vld [vmem:[#allocation8 + $0x3c8] sm:$0xff]
    %v328 = vld [vmem:[#allocation8 + $0x3d0] sm:$0xff]
    %v329 = vld [vmem:[#allocation8 + $0x3d8] sm:$0xff]
    %v330 = vld [vmem:[#allocation8 + $0x3e0] sm:$0xff]
    %v331 = vld [vmem:[#allocation8 + $0x3e8] sm:$0xff]
    %v332 = vld [vmem:[#allocation8 + $0x3f0] sm:$0xff]
    %v333 = vld [vmem:[#allocation8 + $0x3f8] sm:$0xff]
    %v334 = vld [vmem:[#allocation8 + $0x400] sm:$0xff]
    %v335 = vld [vmem:[#allocation8 + $0x408] sm:$0xff]
    %v336 = vld [vmem:[#allocation8 + $0x410] sm:$0xff]
    %v337 = vld [vmem:[#allocation8 + $0x418] sm:$0xff]
    %v338 = vld [vmem:[#allocation8 + $0x420] sm:$0xff]
    %v339 = vld [vmem:[#allocation8 + $0x428] sm:$0xff]
    %v340 = vld [vmem:[#allocation8 + $0x430] sm:$0xff]
    %v341 = vld [vmem:[#allocation8 + $0x438] sm:$0xff]
    %v342 = vld [vmem:[#allocation8 + $0x440] sm:$0xff]
    %v343 = vld [vmem:[#allocation8 + $0x448] sm:$0xff]
    %v344 = vld [vmem:[#allocation8 + $0x450] sm:$0xff]
    %v345 = vld [vmem:[#allocation8 + $0x458] sm:$0xff]
    %v346 = vld [vmem:[#allocation8 + $0x460] sm:$0xff]
    %v347 = vld [vmem:[#allocation8 + $0x468] sm:$0xff]
    %v348 = vld [vmem:[#allocation8 + $0x470] sm:$0xff]
    %v349 = vld [vmem:[#allocation8 + $0x478] sm:$0xff]
    %v350 = vld [vmem:[#allocation8 + $0x480] sm:$0xff]
    %v351 = vld [vmem:[#allocation8 + $0x488] sm:$0xff]
    %v352 = vld [vmem:[#allocation8 + $0x490] sm:$0xff]
    %v353 = vld [vmem:[#allocation8 + $0x498] sm:$0xff]
    %v354 = vld [vmem:[#allocation8 + $0x4a0] sm:$0xff]
    %v355 = vld [vmem:[#allocation8 + $0x4a8] sm:$0xff]
    %v356 = vld [vmem:[#allocation8 + $0x4b0] sm:$0xff]
    %v357 = vld [vmem:[#allocation8 + $0x4b8] sm:$0xff]
    %v358 = vld [vmem:[#allocation8 + $0x4c0] sm:$0xff]
    %v359 = vld [vmem:[#allocation8 + $0x4c8] sm:$0xff]
    %v360 = vld [vmem:[#allocation8 + $0x4d0] sm:$0xff]
    %v361 = vld [vmem:[#allocation8 + $0x4d8] sm:$0xff]
    %v362 = vld [vmem:[#allocation8 + $0x4e0] sm:$0xff]
    %v363 = vld [vmem:[#allocation8 + $0x4e8] sm:$0xff]
    %v364 = vld [vmem:[#allocation8 + $0x4f0] sm:$0xff]
    %v365 = vld [vmem:[#allocation8 + $0x4f8] sm:$0xff]
    %v366 = vld [vmem:[#allocation8 + $0x500] sm:$0xff]
    %v367 = vld [vmem:[#allocation8 + $0x508] sm:$0xff]
    %v368 = vld [vmem:[#allocation8 + $0x510] sm:$0xff]
    %v369 = vld [vmem:[#allocation8 + $0x518] sm:$0xff]
    %v370 = vld [vmem:[#allocation8 + $0x520] sm:$0xff]
    %v371 = vld [vmem:[#allocation8 + $0x528] sm:$0xff]
    %v372 = vld [vmem:[#allocation8 + $0x530] sm:$0xff]
    %v373 = vld [vmem:[#allocation8 + $0x538] sm:$0xff]
    %v374 = vld [vmem:[#allocation8 + $0x540] sm:$0xff]
    %v375 = vld [vmem:[#allocation8 + $0x548] sm:$0xff]
    %v376 = vld [vmem:[#allocation8 + $0x550] sm:$0xff]
    %v377 = vld [vmem:[#allocation8 + $0x558] sm:$0xff]
    %v378 = vld [vmem:[#allocation8 + $0x560] sm:$0xff]
    %v379 = vld [vmem:[#allocation8 + $0x568] sm:$0xff]
    %v380 = vld [vmem:[#allocation8 + $0x570] sm:$0xff]
    %v381 = vld [vmem:[#allocation8 + $0x578] sm:$0xff]
    %v382 = vld [vmem:[#allocation8 + $0x580] sm:$0xff]
    %v383 = vld [vmem:[#allocation8 + $0x588] sm:$0xff]
    %v384 = vld [vmem:[#allocation8 + $0x590] sm:$0xff]
    %v385 = vld [vmem:[#allocation8 + $0x598] sm:$0xff]
    %v386 = vld [vmem:[#allocation8 + $0x5a0] sm:$0xff]
    %v387 = vld [vmem:[#allocation8 + $0x5a8] sm:$0xff]
    %v388 = vld [vmem:[#allocation8 + $0x5b0] sm:$0xff]
    %v389 = vld [vmem:[#allocation8 + $0x5b8] sm:$0xff]
    %v390 = vld [vmem:[#allocation8 + $0x5c0] sm:$0xff]
    %v391 = vld [vmem:[#allocation8 + $0x5c8] sm:$0xff]
    %v392 = vld [vmem:[#allocation8 + $0x5d0] sm:$0xff]
    %v393 = vld [vmem:[#allocation8 + $0x5d8] sm:$0xff]
    %v394 = vld [vmem:[#allocation8 + $0x5e0] sm:$0xff]
    %v395 = vld [vmem:[#allocation8 + $0x5e8] sm:$0xff]
    %v396 = vld [vmem:[#allocation8 + $0x5f0] sm:$0xff]
    %v397 = vld [vmem:[#allocation8 + $0x5f8] sm:$0xff]
    %v398 = vld [vmem:[#allocation8 + $0x600] sm:$0xff]
    %v399 = vld [vmem:[#allocation8 + $0x608] sm:$0xff]
    %v400 = vld [vmem:[#allocation8 + $0x610] sm:$0xff]
    %v401 = vld [vmem:[#allocation8 + $0x618] sm:$0xff]
    %v402 = vld [vmem:[#allocation8 + $0x620] sm:$0xff]
    %v403 = vld [vmem:[#allocation8 + $0x628] sm:$0xff]
    %v404 = vld [vmem:[#allocation8 + $0x630] sm:$0xff]
    %v405 = vld [vmem:[#allocation8 + $0x638] sm:$0xff]
    %v406 = vld [vmem:[#allocation8 + $0x640] sm:$0xff]
    %v407 = vld [vmem:[#allocation8 + $0x648] sm:$0xff]
    %v408 = vld [vmem:[#allocation8 + $0x650] sm:$0xff]
    %v409 = vld [vmem:[#allocation8 + $0x658] sm:$0xff]
    %v410 = vld [vmem:[#allocation8 + $0x660] sm:$0xff]
    %v411 = vld [vmem:[#allocation8 + $0x668] sm:$0xff]
    %v412 = vld [vmem:[#allocation8 + $0x670] sm:$0xff]
    %v413 = vld [vmem:[#allocation8 + $0x678] sm:$0xff]
    %v414 = vld [vmem:[#allocation8 + $0x680] sm:$0xff]
    %v415 = vld [vmem:[#allocation8 + $0x688] sm:$0xff]
    %v416 = vld [vmem:[#allocation8 + $0x690] sm:$0xff]
    %v417 = vld [vmem:[#allocation8 + $0x698] sm:$0xff]
    %v418 = vld [vmem:[#allocation8 + $0x6a0] sm:$0xff]
    %v419 = vld [vmem:[#allocation8 + $0x6a8] sm:$0xff]
    %v420 = vld [vmem:[#allocation8 + $0x6b0] sm:$0xff]
    %v421 = vld [vmem:[#allocation8 + $0x6b8] sm:$0xff]
    %v422 = vld [vmem:[#allocation8 + $0x6c0] sm:$0xff]
    %v423 = vld [vmem:[#allocation8 + $0x6c8] sm:$0xff]
    %v424 = vld [vmem:[#allocation8 + $0x6d0] sm:$0xff]
    %v425 = vld [vmem:[#allocation8 + $0x6d8] sm:$0xff]
    %v426 = vld [vmem:[#allocation8 + $0x6e0] sm:$0xff]
    %v427 = vld [vmem:[#allocation8 + $0x6e8] sm:$0xff]
    %v428 = vld [vmem:[#allocation8 + $0x6f0] sm:$0xff]
    %v429 = vld [vmem:[#allocation8 + $0x6f8] sm:$0xff]
    %v430 = vld [vmem:[#allocation8 + $0x700] sm:$0xff]
    %v431 = vld [vmem:[#allocation8 + $0x708] sm:$0xff]
    %v432 = vld [vmem:[#allocation8 + $0x710] sm:$0xff]
    %v433 = vld [vmem:[#allocation8 + $0x718] sm:$0xff]
    %v434 = vld [vmem:[#allocation8 + $0x720] sm:$0xff]
    %v435 = vld [vmem:[#allocation8 + $0x728] sm:$0xff]
    %v436 = vld [vmem:[#allocation8 + $0x730] sm:$0xff]
    %v437 = vld [vmem:[#allocation8 + $0x738] sm:$0xff]
    %v438 = vld [vmem:[#allocation8 + $0x740] sm:$0xff]
    %v439 = vld [vmem:[#allocation8 + $0x748] sm:$0xff]
    %v440 = vld [vmem:[#allocation8 + $0x750] sm:$0xff]
    %v441 = vld [vmem:[#allocation8 + $0x758] sm:$0xff]
    %v442 = vld [vmem:[#allocation8 + $0x760] sm:$0xff]
    %v443 = vld [vmem:[#allocation8 + $0x768] sm:$0xff]
    %v444 = vld [vmem:[#allocation8 + $0x770] sm:$0xff]
    %v445 = vld [vmem:[#allocation8 + $0x778] sm:$0xff]
    %v446 = vld [vmem:[#allocation8 + $0x780] sm:$0xff]
    %v447 = vld [vmem:[#allocation8 + $0x788] sm:$0xff]
    %v448 = vld [vmem:[#allocation8 + $0x790] sm:$0xff]
    %v449 = vld [vmem:[#allocation8 + $0x798] sm:$0xff]
    %v450 = vld [vmem:[#allocation8 + $0x7a0] sm:$0xff]
    %v451 = vld [vmem:[#allocation8 + $0x7a8] sm:$0xff]
    %v452 = vld [vmem:[#allocation8 + $0x7b0] sm:$0xff]
    %v453 = vld [vmem:[#allocation8 + $0x7b8] sm:$0xff]
    %v454 = vld [vmem:[#allocation8 + $0x7c0] sm:$0xff]
    %v455 = vld [vmem:[#allocation8 + $0x7c8] sm:$0xff]
    %v456 = vld [vmem:[#allocation8 + $0x7d0] sm:$0xff]
    %v457 = vld [vmem:[#allocation8 + $0x7d8] sm:$0xff]
    %v458 = vld [vmem:[#allocation8 + $0x7e0] sm:$0xff]
    %v459 = vld [vmem:[#allocation8 + $0x7e8] sm:$0xff]
    %v460 = vld [vmem:[#allocation8 + $0x7f0] sm:$0xff]
    %v461 = vld [vmem:[#allocation8 + $0x7f8] sm:$0xff]
    %v462 = vld [vmem:[#allocation10] sm:$0xff]
    %v463 = vld [vmem:[#allocation10 + $0x8] sm:$0xff]
    %v466 = vperm.slane %v462, 0
    %v467 = vperm.slane %v462, 1
    %v468 = vperm.slane %v462, 2
    %v469 = vperm.slane %v462, 3
    %v470 = vperm.slane %v462, 4
    %v471 = vperm.slane %v462, 5
    %v472 = vperm.slane %v462, 6
    %v473 = vperm.slane %v462, 7
    %v474 = vperm.slane %v463, 0
    %v475 = vperm.slane %v463, 1
    %v476 = vperm.slane %v463, 2
    %v477 = vperm.slane %v463, 3
    %v478 = vperm.slane %v463, 4
    %v479 = vperm.slane %v463, 5
    %v480 = vperm.slane %v463, 6
    %v481 = vperm.slane %v463, 7
    %498 = vmatpush.xpose.msra.mxu0 %v221
    %499 = vmatpush.xpose.msra.mxu0 %v220
    %500 = vmatpush.xpose.msra.mxu0 %v219
    %501 = vmatpush.xpose.msra.mxu0 %v218
    %502 = vmatpush.xpose.msra.mxu0 %v217
    %503 = vmatpush.xpose.msra.mxu0 %v216
    %504 = vmatpush.xpose.msra.mxu0 %v215
    %505 = vmatpush.xpose.msra.mxu0 %v214
    %506 = vmatpush.xpose.msra.mxu0 %v213
    %507 = vmatpush.xpose.msra.mxu0 %v212
    %508 = vmatpush.xpose.msra.mxu0 %v211
    %509 = vmatpush.xpose.msra.mxu0 %v210
    %510 = vmatpush.xpose.msra.mxu0 %v209
    %511 = vmatpush.xpose.msra.mxu0 %v208
    %512 = vmatpush.xpose.msra.mxu0 %v207
    %513 = vmatpush.xpose.msra.mxu0 %v206
    %514 = vmatmul.f32.gmra.mxu0 %v205
    %v515 = vpop.f32.mrf.mxu0
    %v516 = vadd.f32 %v466, %v515
    %517 = vdwg.mxu0
    %518 = vmatpush.xpose.msra.mxu0 %v237
    %519 = vmatpush.xpose.msra.mxu0 %v236
    %520 = vmatpush.xpose.msra.mxu0 %v235
    %521 = vmatpush.xpose.msra.mxu0 %v234
    %522 = vmatpush.xpose.msra.mxu0 %v233
    %523 = vmatpush.xpose.msra.mxu0 %v232
    %524 = vmatpush.xpose.msra.mxu0 %v231
    %525 = vmatpush.xpose.msra.mxu0 %v230
    %526 = vmatpush.xpose.msra.mxu0 %v229
    %527 = vmatpush.xpose.msra.mxu0 %v228
    %528 = vmatpush.xpose.msra.mxu0 %v227
    %529 = vmatpush.xpose.msra.mxu0 %v226
    %530 = vmatpush.xpose.msra.mxu0 %v225
    %531 = vmatpush.xpose.msra.mxu0 %v224
    %532 = vmatpush.xpose.msra.mxu0 %v223
    %533 = vmatpush.xpose.msra.mxu0 %v222
    %534 = vmatmul.f32.gmra.mxu0 %v205
    %v535 = vpop.f32.mrf.mxu0
    %v536 = vadd.f32 %v467, %v535
    %537 = vdwg.mxu0
    %538 = vmatpush.xpose.msra.mxu0 %v253
    %539 = vmatpush.xpose.msra.mxu0 %v252
    %540 = vmatpush.xpose.msra.mxu0 %v251
    %541 = vmatpush.xpose.msra.mxu0 %v250
    %542 = vmatpush.xpose.msra.mxu0 %v249
    %543 = vmatpush.xpose.msra.mxu0 %v248
    %544 = vmatpush.xpose.msra.mxu0 %v247
    %545 = vmatpush.xpose.msra.mxu0 %v246
    %546 = vmatpush.xpose.msra.mxu0 %v245
    %547 = vmatpush.xpose.msra.mxu0 %v244
    %548 = vmatpush.xpose.msra.mxu0 %v243
    %549 = vmatpush.xpose.msra.mxu0 %v242
    %550 = vmatpush.xpose.msra.mxu0 %v241
    %551 = vmatpush.xpose.msra.mxu0 %v240
    %552 = vmatpush.xpose.msra.mxu0 %v239
    %553 = vmatpush.xpose.msra.mxu0 %v238
    %554 = vmatmul.f32.gmra.mxu0 %v205
    %v555 = vpop.f32.mrf.mxu0
    %v556 = vadd.f32 %v468, %v555
    %557 = vdwg.mxu0
    %558 = vmatpush.xpose.msra.mxu0 %v269
    %559 = vmatpush.xpose.msra.mxu0 %v268
    %560 = vmatpush.xpose.msra.mxu0 %v267
    %561 = vmatpush.xpose.msra.mxu0 %v266
    %562 = vmatpush.xpose.msra.mxu0 %v265
    %563 = vmatpush.xpose.msra.mxu0 %v264
    %564 = vmatpush.xpose.msra.mxu0 %v263
    %565 = vmatpush.xpose.msra.mxu0 %v262
    %566 = vmatpush.xpose.msra.mxu0 %v261
    %567 = vmatpush.xpose.msra.mxu0 %v260
    %568 = vmatpush.xpose.msra.mxu0 %v259
    %569 = vmatpush.xpose.msra.mxu0 %v258
    %570 = vmatpush.xpose.msra.mxu0 %v257
    %571 = vmatpush.xpose.msra.mxu0 %v256
    %572 = vmatpush.xpose.msra.mxu0 %v255
    %573 = vmatpush.xpose.msra.mxu0 %v254
    %574 = vmatmul.f32.gmra.mxu0 %v205
    %v575 = vpop.f32.mrf.mxu0
    %v576 = vadd.f32 %v469, %v575
    %577 = vdwg.mxu0
    %578 = vmatpush.xpose.msra.mxu0 %v285
    %579 = vmatpush.xpose.msra.mxu0 %v284
    %580 = vmatpush.xpose.msra.mxu0 %v283
    %581 = vmatpush.xpose.msra.mxu0 %v282
    %582 = vmatpush.xpose.msra.mxu0 %v281
    %583 = vmatpush.xpose.msra.mxu0 %v280
    %584 = vmatpush.xpose.msra.mxu0 %v279
    %585 = vmatpush.xpose.msra.mxu0 %v278
    %586 = vmatpush.xpose.msra.mxu0 %v277
    %587 = vmatpush.xpose.msra.mxu0 %v276
    %588 = vmatpush.xpose.msra.mxu0 %v275
    %589 = vmatpush.xpose.msra.mxu0 %v274
    %590 = vmatpush.xpose.msra.mxu0 %v273
    %591 = vmatpush.xpose.msra.mxu0 %v272
    %592 = vmatpush.xpose.msra.mxu0 %v271
    %593 = vmatpush.xpose.msra.mxu0 %v270
    %594 = vmatmul.f32.gmra.mxu0 %v205
    %v595 = vpop.f32.mrf.mxu0
    %v596 = vadd.f32 %v470, %v595
    %597 = vdwg.mxu0
    %598 = vmatpush.xpose.msra.mxu0 %v301
    %599 = vmatpush.xpose.msra.mxu0 %v300
    %600 = vmatpush.xpose.msra.mxu0 %v299
    %601 = vmatpush.xpose.msra.mxu0 %v298
    %602 = vmatpush.xpose.msra.mxu0 %v297
    %603 = vmatpush.xpose.msra.mxu0 %v296
    %604 = vmatpush.xpose.msra.mxu0 %v295
    %605 = vmatpush.xpose.msra.mxu0 %v294
    %606 = vmatpush.xpose.msra.mxu0 %v293
    %607 = vmatpush.xpose.msra.mxu0 %v292
    %608 = vmatpush.xpose.msra.mxu0 %v291
    %609 = vmatpush.xpose.msra.mxu0 %v290
    %610 = vmatpush.xpose.msra.mxu0 %v289
    %611 = vmatpush.xpose.msra.mxu0 %v288
    %612 = vmatpush.xpose.msra.mxu0 %v287
    %613 = vmatpush.xpose.msra.mxu0 %v286
    %614 = vmatmul.f32.gmra.mxu0 %v205
    %v615 = vpop.f32.mrf.mxu0
    %v616 = vadd.f32 %v471, %v615
    %617 = vdwg.mxu0
    %618 = vmatpush.xpose.msra.mxu0 %v317
    %619 = vmatpush.xpose.msra.mxu0 %v316
    %620 = vmatpush.xpose.msra.mxu0 %v315
    %621 = vmatpush.xpose.msra.mxu0 %v314
    %622 = vmatpush.xpose.msra.mxu0 %v313
    %623 = vmatpush.xpose.msra.mxu0 %v312
    %624 = vmatpush.xpose.msra.mxu0 %v311
    %625 = vmatpush.xpose.msra.mxu0 %v310
    %626 = vmatpush.xpose.msra.mxu0 %v309
    %627 = vmatpush.xpose.msra.mxu0 %v308
    %628 = vmatpush.xpose.msra.mxu0 %v307
    %629 = vmatpush.xpose.msra.mxu0 %v306
    %630 = vmatpush.xpose.msra.mxu0 %v305
    %631 = vmatpush.xpose.msra.mxu0 %v304
    %632 = vmatpush.xpose.msra.mxu0 %v303
    %633 = vmatpush.xpose.msra.mxu0 %v302
    %634 = vmatmul.f32.gmra.mxu0 %v205
    %v635 = vpop.f32.mrf.mxu0
    %v636 = vadd.f32 %v472, %v635
    %637 = vdwg.mxu0
    %638 = vmatpush.xpose.msra.mxu0 %v333
    %639 = vmatpush.xpose.msra.mxu0 %v332
    %640 = vmatpush.xpose.msra.mxu0 %v331
    %641 = vmatpush.xpose.msra.mxu0 %v330
    %642 = vmatpush.xpose.msra.mxu0 %v329
    %643 = vmatpush.xpose.msra.mxu0 %v328
    %644 = vmatpush.xpose.msra.mxu0 %v327
    %645 = vmatpush.xpose.msra.mxu0 %v326
    %646 = vmatpush.xpose.msra.mxu0 %v325
    %647 = vmatpush.xpose.msra.mxu0 %v324
    %648 = vmatpush.xpose.msra.mxu0 %v323
    %649 = vmatpush.xpose.msra.mxu0 %v322
    %650 = vmatpush.xpose.msra.mxu0 %v321
    %651 = vmatpush.xpose.msra.mxu0 %v320
    %652 = vmatpush.xpose.msra.mxu0 %v319
    %653 = vmatpush.xpose.msra.mxu0 %v318
    %654 = vmatmul.f32.gmra.mxu0 %v205
    %v655 = vpop.f32.mrf.mxu0
    %v656 = vadd.f32 %v473, %v655
    %657 = vdwg.mxu0
    %658 = vmatpush.xpose.msra.mxu0 %v349
    %659 = vmatpush.xpose.msra.mxu0 %v348
    %660 = vmatpush.xpose.msra.mxu0 %v347
    %661 = vmatpush.xpose.msra.mxu0 %v346
    %662 = vmatpush.xpose.msra.mxu0 %v345
    %663 = vmatpush.xpose.msra.mxu0 %v344
    %664 = vmatpush.xpose.msra.mxu0 %v343
    %665 = vmatpush.xpose.msra.mxu0 %v342
    %666 = vmatpush.xpose.msra.mxu0 %v341
    %667 = vmatpush.xpose.msra.mxu0 %v340
    %668 = vmatpush.xpose.msra.mxu0 %v339
    %669 = vmatpush.xpose.msra.mxu0 %v338
    %670 = vmatpush.xpose.msra.mxu0 %v337
    %671 = vmatpush.xpose.msra.mxu0 %v336
    %672 = vmatpush.xpose.msra.mxu0 %v335
    %673 = vmatpush.xpose.msra.mxu0 %v334
    %674 = vmatmul.f32.gmra.mxu0 %v205
    %v675 = vpop.f32.mrf.mxu0
    %v676 = vadd.f32 %v474, %v675
    %677 = vdwg.mxu0
    %678 = vmatpush.xpose.msra.mxu0 %v365
    %679 = vmatpush.xpose.msra.mxu0 %v364
    %680 = vmatpush.xpose.msra.mxu0 %v363
    %681 = vmatpush.xpose.msra.mxu0 %v362
    %682 = vmatpush.xpose.msra.mxu0 %v361
    %683 = vmatpush.xpose.msra.mxu0 %v360
    %684 = vmatpush.xpose.msra.mxu0 %v359
    %685 = vmatpush.xpose.msra.mxu0 %v358
    %686 = vmatpush.xpose.msra.mxu0 %v357
    %687 = vmatpush.xpose.msra.mxu0 %v356
    %688 = vmatpush.xpose.msra.mxu0 %v355
    %689 = vmatpush.xpose.msra.mxu0 %v354
    %690 = vmatpush.xpose.msra.mxu0 %v353
    %691 = vmatpush.xpose.msra.mxu0 %v352
    %692 = vmatpush.xpose.msra.mxu0 %v351
    %693 = vmatpush.xpose.msra.mxu0 %v350
    %694 = vmatmul.f32.gmra.mxu0 %v205
    %v695 = vpop.f32.mrf.mxu0
    %v696 = vadd.f32 %v475, %v695
    %697 = vdwg.mxu0
    %698 = vmatpush.xpose.msra.mxu0 %v381
    %699 = vmatpush.xpose.msra.mxu0 %v380
    %700 = vmatpush.xpose.msra.mxu0 %v379
    %701 = vmatpush.xpose.msra.mxu0 %v378
    %702 = vmatpush.xpose.msra.mxu0 %v377
    %703 = vmatpush.xpose.msra.mxu0 %v376
    %704 = vmatpush.xpose.msra.mxu0 %v375
    %705 = vmatpush.xpose.msra.mxu0 %v374
    %706 = vmatpush.xpose.msra.mxu0 %v373
    %707 = vmatpush.xpose.msra.mxu0 %v372
    %708 = vmatpush.xpose.msra.mxu0 %v371
    %709 = vmatpush.xpose.msra.mxu0 %v370
    %710 = vmatpush.xpose.msra.mxu0 %v369
    %711 = vmatpush.xpose.msra.mxu0 %v368
    %712 = vmatpush.xpose.msra.mxu0 %v367
    %713 = vmatpush.xpose.msra.mxu0 %v366
    %714 = vmatmul.f32.gmra.mxu0 %v205
    %v715 = vpop.f32.mrf.mxu0
    %v716 = vadd.f32 %v476, %v715
    %717 = vdwg.mxu0
    %718 = vmatpush.xpose.msra.mxu0 %v397
    %719 = vmatpush.xpose.msra.mxu0 %v396
    %720 = vmatpush.xpose.msra.mxu0 %v395
    %721 = vmatpush.xpose.msra.mxu0 %v394
    %722 = vmatpush.xpose.msra.mxu0 %v393
    %723 = vmatpush.xpose.msra.mxu0 %v392
    %724 = vmatpush.xpose.msra.mxu0 %v391
    %725 = vmatpush.xpose.msra.mxu0 %v390
    %726 = vmatpush.xpose.msra.mxu0 %v389
    %727 = vmatpush.xpose.msra.mxu0 %v388
    %728 = vmatpush.xpose.msra.mxu0 %v387
    %729 = vmatpush.xpose.msra.mxu0 %v386
    %730 = vmatpush.xpose.msra.mxu0 %v385
    %731 = vmatpush.xpose.msra.mxu0 %v384
    %732 = vmatpush.xpose.msra.mxu0 %v383
    %733 = vmatpush.xpose.msra.mxu0 %v382
    %734 = vmatmul.f32.gmra.mxu0 %v205
    %v735 = vpop.f32.mrf.mxu0
    %v736 = vadd.f32 %v477, %v735
    %737 = vdwg.mxu0
    %738 = vmatpush.xpose.msra.mxu0 %v413
    %739 = vmatpush.xpose.msra.mxu0 %v412
    %740 = vmatpush.xpose.msra.mxu0 %v411
    %741 = vmatpush.xpose.msra.mxu0 %v410
    %742 = vmatpush.xpose.msra.mxu0 %v409
    %743 = vmatpush.xpose.msra.mxu0 %v408
    %744 = vmatpush.xpose.msra.mxu0 %v407
    %745 = vmatpush.xpose.msra.mxu0 %v406
    %746 = vmatpush.xpose.msra.mxu0 %v405
    %747 = vmatpush.xpose.msra.mxu0 %v404
    %748 = vmatpush.xpose.msra.mxu0 %v403
    %749 = vmatpush.xpose.msra.mxu0 %v402
    %750 = vmatpush.xpose.msra.mxu0 %v401
    %751 = vmatpush.xpose.msra.mxu0 %v400
    %752 = vmatpush.xpose.msra.mxu0 %v399
    %753 = vmatpush.xpose.msra.mxu0 %v398
    %754 = vmatmul.f32.gmra.mxu0 %v205
    %v755 = vpop.f32.mrf.mxu0
    %v756 = vadd.f32 %v478, %v755
    %757 = vdwg.mxu0
    %758 = vmatpush.xpose.msra.mxu0 %v429
    %759 = vmatpush.xpose.msra.mxu0 %v428
    %760 = vmatpush.xpose.msra.mxu0 %v427
    %761 = vmatpush.xpose.msra.mxu0 %v426
    %762 = vmatpush.xpose.msra.mxu0 %v425
    %763 = vmatpush.xpose.msra.mxu0 %v424
    %764 = vmatpush.xpose.msra.mxu0 %v423
    %765 = vmatpush.xpose.msra.mxu0 %v422
    %766 = vmatpush.xpose.msra.mxu0 %v421
    %767 = vmatpush.xpose.msra.mxu0 %v420
    %768 = vmatpush.xpose.msra.mxu0 %v419
    %769 = vmatpush.xpose.msra.mxu0 %v418
    %770 = vmatpush.xpose.msra.mxu0 %v417
    %771 = vmatpush.xpose.msra.mxu0 %v416
    %772 = vmatpush.xpose.msra.mxu0 %v415
    %773 = vmatpush.xpose.msra.mxu0 %v414
    %774 = vmatmul.f32.gmra.mxu0 %v205
    %v775 = vpop.f32.mrf.mxu0
    %v776 = vadd.f32 %v479, %v775
    %777 = vdwg.mxu0
    %778 = vmatpush.xpose.msra.mxu0 %v445
    %779 = vmatpush.xpose.msra.mxu0 %v444
    %780 = vmatpush.xpose.msra.mxu0 %v443
    %781 = vmatpush.xpose.msra.mxu0 %v442
    %782 = vmatpush.xpose.msra.mxu0 %v441
    %783 = vmatpush.xpose.msra.mxu0 %v440
    %784 = vmatpush.xpose.msra.mxu0 %v439
    %785 = vmatpush.xpose.msra.mxu0 %v438
    %786 = vmatpush.xpose.msra.mxu0 %v437
    %787 = vmatpush.xpose.msra.mxu0 %v436
    %788 = vmatpush.xpose.msra.mxu0 %v435
    %789 = vmatpush.xpose.msra.mxu0 %v434
    %790 = vmatpush.xpose.msra.mxu0 %v433
    %791 = vmatpush.xpose.msra.mxu0 %v432
    %792 = vmatpush.xpose.msra.mxu0 %v431
    %793 = vmatpush.xpose.msra.mxu0 %v430
    %794 = vmatmul.f32.gmra.mxu0 %v205
    %v795 = vpop.f32.mrf.mxu0
    %v796 = vadd.f32 %v480, %v795
    %797 = vdwg.mxu0
    %798 = vmatpush.xpose.msra.mxu0 %v461
    %799 = vmatpush.xpose.msra.mxu0 %v460
    %800 = vmatpush.xpose.msra.mxu0 %v459
    %801 = vmatpush.xpose.msra.mxu0 %v458
    %802 = vmatpush.xpose.msra.mxu0 %v457
    %803 = vmatpush.xpose.msra.mxu0 %v456
    %804 = vmatpush.xpose.msra.mxu0 %v455
    %805 = vmatpush.xpose.msra.mxu0 %v454
    %806 = vmatpush.xpose.msra.mxu0 %v453
    %807 = vmatpush.xpose.msra.mxu0 %v452
    %808 = vmatpush.xpose.msra.mxu0 %v451
    %809 = vmatpush.xpose.msra.mxu0 %v450
    %810 = vmatpush.xpose.msra.mxu0 %v449
    %811 = vmatpush.xpose.msra.mxu0 %v448
    %812 = vmatpush.xpose.msra.mxu0 %v447
    %813 = vmatpush.xpose.msra.mxu0 %v446
    %814 = vmatmul.f32.gmra.mxu0 %v205
    %v815 = vpop.f32.mrf.mxu0
    %v816 = vadd.f32 %v481, %v815
    %817 = vdwg.mxu0
    %818 = vst [vmem:[#allocation11] sm:$0xff] %v516
    %819 = vst [vmem:[#allocation11 + $0x8] sm:$0xff] %v536
    %820 = vst [vmem:[#allocation11 + $0x10] sm:$0xff] %v556
    %821 = vst [vmem:[#allocation11 + $0x18] sm:$0xff] %v576
    %822 = vst [vmem:[#allocation11 + $0x20] sm:$0xff] %v596
    %823 = vst [vmem:[#allocation11 + $0x28] sm:$0xff] %v616
    %824 = vst [vmem:[#allocation11 + $0x30] sm:$0xff] %v636
    %825 = vst [vmem:[#allocation11 + $0x38] sm:$0xff] %v656
    %826 = vst [vmem:[#allocation11 + $0x40] sm:$0xff] %v676
    %827 = vst [vmem:[#allocation11 + $0x48] sm:$0xff] %v696
    %828 = vst [vmem:[#allocation11 + $0x50] sm:$0xff] %v716
    %829 = vst [vmem:[#allocation11 + $0x58] sm:$0xff] %v736
    %830 = vst [vmem:[#allocation11 + $0x60] sm:$0xff] %v756
    %831 = vst [vmem:[#allocation11 + $0x68] sm:$0xff] %v776
    %832 = vst [vmem:[#allocation11 + $0x70] sm:$0xff] %v796
    %833 = vst [vmem:[#allocation11 + $0x78] sm:$0xff] %v816
    // Predicated region
    $region26: #{tpu_custom_call.1} parent=1 // pred_check
      _
    $region27: #{tpu_custom_call.1} parent=1 // pred_check_branch
      %835 = sbr.rel (0) target = $region29
    $region28: #{tpu_custom_call.1} parent=1 // pred_region
      %837 = vsyncadd [#allocation7], 0
      %s839 = sshll.u32 [#allocation11], 4
      %s840 = int_to_ptr.vmem [resolvable:$true] %s839
      %s841 = sshll.u32 %s4, 4
      %s842 = int_to_ptr.hbm [resolvable:$true] %s841
      %844 = dma.vmem_to_hbm [thread:$0]  %s840, 2048, %s842, [#allocation7]
    $region29: #{tpu_custom_call.1} parent=1 // pred_fallthru
      _
    // Predicated region
    $region30: #{tpu_custom_call.1} parent=1 // pred_check
      _
    $region31: #{tpu_custom_call.1} parent=1 // pred_check_branch
      %846 = sbr.rel (0) target = $region33
    $region32: #{tpu_custom_call.1} parent=1 // pred_region
      %848 = dma.done [#allocation7], 2048
    $region33: #{tpu_custom_call.1} parent=1 // pred_fallthru
      _
    %849 = vsyncpa [#allocation6], 1
    %850 = vsyncpa [#allocation9], 1
    %851 = vsyncpa [#allocation7], 1

</llo_original>
